<compile_context>
chip_gen: v6e
topology: v6e:2x2x1
jax: 0.10.0
libtpu: 0.0.40
codegen_flags: <defaults>
</compile_context>

<pallas_src>
import functools

import jax
import jax.numpy as jnp
from jax.experimental import pallas as pl
from jax.experimental.pallas import tpu as pltpu


# ----------------------------------------------------------------------------
# Fused Pallas kernel: both node-type updates in one body, two outputs
# ----------------------------------------------------------------------------
def _layer_norm(s):
    # nn.LayerNorm(out_feat, elementwise_affine=False): biased var, eps=1e-5
    mean = jnp.mean(s, axis=-1, keepdims=True)
    var = jnp.mean((s - mean) ** 2, axis=-1, keepdims=True)
    return (s - mean) * jax.lax.rsqrt(var + 1e-5)


def _fused_kernel(adj_dd_ref, adj_dt_ref, adj_pp_ref,
                  x_drug_ref, x_protein_ref,
                  w_drug_ref, w_prot_ref,
                  drug_out_ref, prot_out_ref,
                  *, target_num, out_feat):
    F = out_feat
    n_protein = x_protein_ref.shape[0]

    x_drug = x_drug_ref[...]
    x_protein = x_protein_ref[...]
    adj_dt = adj_dt_ref[...]

    # One lane-dense feature transform per node type (3*F lanes each).
    # w_drug lanes: [0:F)=W1, [F:2F)=W3, [2F:3F)=loop_weight
    # w_prot lanes: [0:F)=W4, [F:2F)=loop_weight, [2F:3F)=W2
    y_drug = jnp.dot(x_drug, w_drug_ref[...], preferred_element_type=jnp.float32)
    y_prot = jnp.dot(x_protein, w_prot_ref[...], preferred_element_type=jnp.float32)

    y1 = y_drug[:, 0:F]            # x_drug @ W1
    y3 = y_drug[:, F:2 * F]        # x_drug @ W3
    z3 = y_drug[:, 2 * F:3 * F]    # x_drug @ loop_weight
    y4 = y_prot[:, 0:F]            # x_protein @ W4
    p3 = y_prot[:, F:2 * F]        # x_protein @ loop_weight
    y2 = y_prot[0:target_num, 2 * F:3 * F]   # x_target @ W2

    # ---------------- drug node update ----------------
    z1 = jnp.dot(adj_dd_ref[...], y1, preferred_element_type=jnp.float32)
    z2 = jnp.dot(adj_dt, y2, preferred_element_type=jnp.float32)
    drug_out_ref[...] = _layer_norm(z1 + z2 + z3 + 1e-6).astype(drug_out_ref.dtype)

    # ---------------- protein node update ----------------
    p1 = jnp.dot(adj_pp_ref[...], y4, preferred_element_type=jnp.float32)
    base = p1 + p3
    # p2 = adj_dt^T @ (x_drug @ W3) -> [target_num, F] (transpose-contract on MXU)
    p2 = jax.lax.dot_general(
        adj_dt, y3,
        dimension_numbers=(((0,), (0,)), ((), ())),
        preferred_element_type=jnp.float32)

    # Ragged add: only the first target_num protein rows receive p2.
    # LayerNorm is per-row, so the two row-regions are computed independently.
    prot_out_ref[0:target_num, :] = _layer_norm(
        base[0:target_num, :] + p2 + 1e-6).astype(prot_out_ref.dtype)
    if target_num < n_protein:
        prot_out_ref[target_num:, :] = _layer_norm(
            base[target_num:, :] + 1e-6).astype(prot_out_ref.dtype)


def _fused_node_update(adj_dd, adj_dt, adj_pp, x_drug, x_protein,
                       w_drug, w_prot, *, target_num):
    n_drug, in_feat = x_drug.shape
    n_protein = x_protein.shape[0]
    out_feat = w_drug.shape[1] // 3

    args = (adj_dd, adj_dt, adj_pp, x_drug, x_protein, w_drug, w_prot)

    def _full_spec(shape):
        return pl.BlockSpec(shape, lambda: (0,) * len(shape))

    # Advisory cost estimate: six matmuls + per-row rsqrt.
    flops = 2 * (
        n_drug * in_feat * 3 * out_feat          # x_drug @ [W1|W3|loop]
        + n_protein * in_feat * 3 * out_feat     # x_protein @ [W4|loop|W2]
        + n_drug * n_drug * out_feat             # adj_dd @ y1
        + n_drug * target_num * out_feat         # adj_dt @ y2
        + n_protein * n_protein * out_feat       # adj_pp @ y4
        + n_drug * target_num * out_feat         # adj_dt^T @ y3
    )
    out_bytes = 4 * (n_drug + n_protein) * out_feat
    bytes_accessed = 4 * sum(a.size for a in args) + out_bytes
    cost = pl.CostEstimate(flops=flops,
                           transcendentals=n_drug + n_protein,
                           bytes_accessed=bytes_accessed)

    # Explicit VMEM limit for the gridless call (everything resident once),
    # with headroom, capped below v7x's 64 MiB physical VMEM.
    need = 2 * (4 * sum(a.size for a in args) + out_bytes)
    vmem_limit = int(min(max(need, 16 << 20), 48 << 20))

    kernel = functools.partial(_fused_kernel,
                               target_num=target_num,
                               out_feat=out_feat)

    drug_out, prot_out = pl.pallas_call(
        kernel,
        out_shape=(jax.ShapeDtypeStruct((n_drug, out_feat), jnp.float32),
                   jax.ShapeDtypeStruct((n_protein, out_feat), jnp.float32)),
        in_specs=[_full_spec(a.shape) for a in args],
        out_specs=(_full_spec((n_drug, out_feat)),
                   _full_spec((n_protein, out_feat))),
        cost_estimate=cost,
        compiler_params=pltpu.CompilerParams(vmem_limit_bytes=vmem_limit),
    )(*args)

    return drug_out, prot_out


# ----------------------------------------------------------------------------
# Parameter setup (done once, outside the per-step forward)
# ----------------------------------------------------------------------------
def _xavier_uniform(key, shape, gain):
    fan_in, fan_out = shape[1], shape[0]
    bound = gain * jnp.sqrt(6.0 / (fan_in + fan_out))
    return jax.random.uniform(key, shape, jnp.float32, -bound, bound)


def init_params(key, in_feat, out_feat, num_base):
    assert in_feat % num_base == 0 and out_feat % num_base == 0
    si, so = in_feat // num_base, out_feat // num_base
    gain = jnp.sqrt(2.0)  # calculate_gain('relu')
    ks = jax.random.split(key, 6)
    return {
        "weight1": _xavier_uniform(ks[0], (1, num_base * si * so), gain),
        "weight2": _xavier_uniform(ks[1], (1, num_base * si * so), gain),
        "weight3": _xavier_uniform(ks[2], (1, num_base * si * so), gain),
        "weight4": _xavier_uniform(ks[3], (1, num_base * si * so), gain),
        "loop_weight": _xavier_uniform(ks[4], (in_feat, out_feat), gain),
        # loop_weight_p exists in the PyTorch module but is never used in forward.
    }


def _block_diag(w_flat, num_base, si, so):
    """(1, B*si*so) -> block-diagonal (B*si, B*so): exact equivalent of the
    per-basis einsum (off-block entries are exact zeros)."""
    w = w_flat.reshape(num_base, si, so)
    eye = jnp.eye(num_base, dtype=w.dtype)
    return jnp.einsum("bij,bc->bicj", w, eye).reshape(num_base * si, num_base * so)


def materialize_weights(params, num_base, in_feat, out_feat):
    """Hoisted out of the per-forward path: pure function of the parameters.
    Stacks the per-relation weights along the lane dim so the kernel does a
    single lane-dense feature-transform matmul per node type."""
    si, so = in_feat // num_base, out_feat // num_base
    w1 = _block_diag(params["weight1"], num_base, si, so)
    w2 = _block_diag(params["weight2"], num_base, si, so)
    w3 = _block_diag(params["weight3"], num_base, si, so)
    w4 = _block_diag(params["weight4"], num_base, si, so)
    loop = params["loop_weight"]
    return {
        "w_drug": jnp.concatenate([w1, w3, loop], axis=1),   # [in, 3*out]
        "w_prot": jnp.concatenate([w4, loop, w2], axis=1),   # [in, 3*out]
    }


# ----------------------------------------------------------------------------
# Module forward (dropout defined in __init__ is unused in the PyTorch forward)
# ----------------------------------------------------------------------------
@functools.partial(jax.jit, static_argnames=("target_num",))
def multi_rela_graph_node_update_forward(dense_w, x_drug, x_protein, adj_list,
                                         target_num):
    adj_dd, adj_dt, adj_pp = adj_list[0], adj_list[1], adj_list[2]
    return _fused_node_update(
        adj_dd, adj_dt, adj_pp, x_drug, x_protein,
        dense_w["w_drug"], dense_w["w_prot"], target_num=target_num)


# ----------------------------------------------------------------------------
# Pure-JAX reference (mirrors the PyTorch forward exactly)
# ----------------------------------------------------------------------------
def _reference(params, x_drug, x_protein, adj_list, num_base, target_num):
    in_feat = x_drug.shape[1]
    out_feat = params["loop_weight"].shape[1]
    si, so = in_feat // num_base, out_feat // num_base

    def basis_mm(x, w_flat):
        w = w_flat.reshape(num_base, si, so)
        h = x.reshape(-1, num_base, si)
        return jnp.einsum("abc,bcd->abd", h, w).reshape(-1, out_feat)

    def layer_norm(x):
        mean = jnp.mean(x, axis=-1, keepdims=True)
        var = jnp.mean((x - mean) ** 2, axis=-1, keepdims=True)
        return (x - mean) / jnp.sqrt(var + 1e-5)

    adj_dd, adj_dt, adj_pp = adj_list
    x_target = x_protein[:target_num]

    # drug
    x1 = adj_dd @ basis_mm(x_drug, params["weight1"])
    x2 = adj_dt @ basis_mm(x_target, params["weight2"])
    x3 = x_drug @ params["loop_weight"]
    drug_new = layer_norm(x1 + x2 + x3 + 1e-6)

    # protein
    p1 = adj_pp @ basis_mm(x_protein, params["weight4"])
    p2 = adj_dt.T @ basis_mm(x_drug, params["weight3"])
    p3 = x_protein @ params["loop_weight"]
    p_new = p1 + p3
    p_new = p_new.at[:target_num].add(p2)
    protein_new = layer_norm(p_new + 1e-6)

    return drug_new, protein_new


# ----------------------------------------------------------------------------
if __name__ == "__main__":
    in_feat, out_feat, num_base = 32, 32, 4
    n_drug, n_protein, target_num = 8, 16, 8
    dp = 0.1  # dropout is defined in __init__ but unused in forward

    key = jax.random.PRNGKey(0)
    k_p, k_xd, k_xp, k_a0, k_a1, k_a2 = jax.random.split(key, 6)

    params = init_params(k_p, in_feat, out_feat, num_base)
    dense_w = materialize_weights(params, num_base, in_feat, out_feat)

    x_drug = jax.random.normal(k_xd, (n_drug, in_feat), jnp.float32)
    x_protein = jax.random.normal(k_xp, (n_protein, in_feat), jnp.float32)
    adj_list = [
        jax.random.uniform(k_a0, (n_drug, n_drug), jnp.float32),        # drug-drug
        jax.random.uniform(k_a1, (n_drug, target_num), jnp.float32),    # drug-target
        jax.random.uniform(k_a2, (n_protein, n_protein), jnp.float32),  # protein-protein
    ]

    drug_new, protein_new = multi_rela_graph_node_update_forward(
        dense_w, x_drug, x_protein, adj_list, target_num)
    jax.block_until_ready((drug_new, protein_new))

    ref_drug, ref_protein = _reference(
        params, x_drug, x_protein, adj_list, num_base, target_num)

    assert drug_new.shape == (n_drug, out_feat)
    assert protein_new.shape == (n_protein, out_feat)
    assert jnp.allclose(drug_new, ref_drug, atol=1e-4, rtol=1e-4)
    assert jnp.allclose(protein_new, ref_protein, atol=1e-4, rtol=1e-4)

    print("KERNEL_OK")
</pallas_src>

<mosaic_0001>
module attributes {stable_mosaic.version = 11 : i64} {
  func.func @_fused_kernel(%arg0: memref<8x8xf32, #tpu.memory_space<vmem>>, %arg1: memref<8x8xf32, #tpu.memory_space<vmem>>, %arg2: memref<16x16xf32, #tpu.memory_space<vmem>>, %arg3: memref<8x32xf32, #tpu.memory_space<vmem>>, %arg4: memref<16x32xf32, #tpu.memory_space<vmem>>, %arg5: memref<32x96xf32, #tpu.memory_space<vmem>>, %arg6: memref<32x96xf32, #tpu.memory_space<vmem>>, %arg7: memref<8x32xf32, #tpu.memory_space<vmem>>, %arg8: memref<16x32xf32, #tpu.memory_space<vmem>>) attributes {dimension_semantics = [], scalar_prefetch = 0 : i64, scratch_operands = 0 : i64, tpu.core_type = #tpu.core_type<tc>} {
    %c0 = arith.constant 0 : index
    %c0_0 = arith.constant 0 : index
    %0 = vector.load %arg3[%c0, %c0_0] : memref<8x32xf32, #tpu.memory_space<vmem>>, vector<8x32xf32>
    %c0_1 = arith.constant 0 : index
    %c0_2 = arith.constant 0 : index
    %1 = vector.load %arg4[%c0_1, %c0_2] : memref<16x32xf32, #tpu.memory_space<vmem>>, vector<16x32xf32>
    %c0_3 = arith.constant 0 : index
    %c0_4 = arith.constant 0 : index
    %2 = vector.load %arg1[%c0_3, %c0_4] : memref<8x8xf32, #tpu.memory_space<vmem>>, vector<8x8xf32>
    %c0_5 = arith.constant 0 : index
    %c0_6 = arith.constant 0 : index
    %3 = vector.load %arg5[%c0_5, %c0_6] : memref<32x96xf32, #tpu.memory_space<vmem>>, vector<32x96xf32>
    %cst = arith.constant dense<0.000000e+00> : vector<8x96xf32>
    %4 = tpu.matmul %0, %3, %cst {dimension_numbers = #tpu.dot_dimension_numbers<[1], [0], [0], [1], [0, 0, 1, 1], [], []>} : vector<8x32xf32>, vector<32x96xf32>, vector<8x96xf32> -> vector<8x96xf32>
    %c0_7 = arith.constant 0 : index
    %c0_8 = arith.constant 0 : index
    %5 = vector.load %arg6[%c0_7, %c0_8] : memref<32x96xf32, #tpu.memory_space<vmem>>, vector<32x96xf32>
    %cst_9 = arith.constant dense<0.000000e+00> : vector<16x96xf32>
    %6 = tpu.matmul %1, %5, %cst_9 {dimension_numbers = #tpu.dot_dimension_numbers<[1], [0], [0], [1], [0, 0, 1, 1], [], []>} : vector<16x32xf32>, vector<32x96xf32>, vector<16x96xf32> -> vector<16x96xf32>
    %7 = vector.extract_strided_slice %4 {offsets = [0, 0], sizes = [8, 32], strides = [1, 1]} : vector<8x96xf32> to vector<8x32xf32>
    %8 = vector.extract_strided_slice %4 {offsets = [0, 32], sizes = [8, 32], strides = [1, 1]} : vector<8x96xf32> to vector<8x32xf32>
    %9 = vector.extract_strided_slice %4 {offsets = [0, 64], sizes = [8, 32], strides = [1, 1]} : vector<8x96xf32> to vector<8x32xf32>
    %10 = vector.extract_strided_slice %6 {offsets = [0, 0], sizes = [16, 32], strides = [1, 1]} : vector<16x96xf32> to vector<16x32xf32>
    %11 = vector.extract_strided_slice %6 {offsets = [0, 32], sizes = [16, 32], strides = [1, 1]} : vector<16x96xf32> to vector<16x32xf32>
    %12 = vector.extract_strided_slice %6 {offsets = [0, 64], sizes = [8, 32], strides = [1, 1]} : vector<16x96xf32> to vector<8x32xf32>
    %c0_10 = arith.constant 0 : index
    %c0_11 = arith.constant 0 : index
    %13 = vector.load %arg0[%c0_10, %c0_11] : memref<8x8xf32, #tpu.memory_space<vmem>>, vector<8x8xf32>
    %cst_12 = arith.constant dense<0.000000e+00> : vector<8x32xf32>
    %14 = tpu.matmul %13, %7, %cst_12 {dimension_numbers = #tpu.dot_dimension_numbers<[1], [0], [0], [1], [0, 0, 1, 1], [], []>} : vector<8x8xf32>, vector<8x32xf32>, vector<8x32xf32> -> vector<8x32xf32>
    %cst_13 = arith.constant dense<0.000000e+00> : vector<8x32xf32>
    %15 = tpu.matmul %2, %12, %cst_13 {dimension_numbers = #tpu.dot_dimension_numbers<[1], [0], [0], [1], [0, 0, 1, 1], [], []>} : vector<8x8xf32>, vector<8x32xf32>, vector<8x32xf32> -> vector<8x32xf32>
    %16 = arith.addf %14, %15 : vector<8x32xf32>
    %17 = arith.addf %16, %9 : vector<8x32xf32>
    %cst_14 = arith.constant 9.99999997E-7 : f32
    %18 = vector.broadcast %cst_14 : f32 to vector<8x32xf32>
    %19 = arith.addf %17, %18 : vector<8x32xf32>
    %cst_15 = arith.constant dense<0.000000e+00> : vector<8xf32>
    %20 = vector.multi_reduction <add>, %19, %cst_15 [1] : vector<8x32xf32> to vector<8xf32>
    %21 = vector.shape_cast %20 : vector<8xf32> to vector<8x1xf32>
    %cst_16 = arith.constant 3.200000e+01 : f32
    %22 = vector.broadcast %cst_16 : f32 to vector<8x1xf32>
    %23 = arith.divf %21, %22 : vector<8x1xf32>
    %24 = vector.broadcast %23 : vector<8x1xf32> to vector<8x32xf32>
    %25 = arith.subf %19, %24 : vector<8x32xf32>
    %26 = arith.mulf %25, %25 : vector<8x32xf32>
    %cst_17 = arith.constant dense<0.000000e+00> : vector<8xf32>
    %27 = vector.multi_reduction <add>, %26, %cst_17 [1] : vector<8x32xf32> to vector<8xf32>
    %28 = vector.shape_cast %27 : vector<8xf32> to vector<8x1xf32>
    %cst_18 = arith.constant 3.200000e+01 : f32
    %29 = vector.broadcast %cst_18 : f32 to vector<8x1xf32>
    %30 = arith.divf %28, %29 : vector<8x1xf32>
    %31 = vector.broadcast %23 : vector<8x1xf32> to vector<8x32xf32>
    %32 = arith.subf %19, %31 : vector<8x32xf32>
    %cst_19 = arith.constant 9.99999974E-6 : f32
    %33 = vector.broadcast %cst_19 : f32 to vector<8x1xf32>
    %34 = arith.addf %30, %33 : vector<8x1xf32>
    %35 = math.rsqrt %34 : vector<8x1xf32>
    %36 = vector.broadcast %35 : vector<8x1xf32> to vector<8x32xf32>
    %37 = arith.mulf %32, %36 : vector<8x32xf32>
    %c0_20 = arith.constant 0 : index
    %c0_21 = arith.constant 0 : index
    %38 = vector.load %arg7[%c0_20, %c0_21] : memref<8x32xf32, #tpu.memory_space<vmem>>, vector<8x32xf32>
    tpu.vector_store %arg7[%c0_20, %c0_21], %37 {strides = array<i32>} : memref<8x32xf32, #tpu.memory_space<vmem>>, vector<8x32xf32>,
    %c0_22 = arith.constant 0 : index
    %c0_23 = arith.constant 0 : index
    %39 = vector.load %arg2[%c0_22, %c0_23] : memref<16x16xf32, #tpu.memory_space<vmem>>, vector<16x16xf32>
    %cst_24 = arith.constant dense<0.000000e+00> : vector<16x32xf32>
    %40 = tpu.matmul %39, %10, %cst_24 {dimension_numbers = #tpu.dot_dimension_numbers<[1], [0], [0], [1], [0, 0, 1, 1], [], []>} : vector<16x16xf32>, vector<16x32xf32>, vector<16x32xf32> -> vector<16x32xf32>
    %41 = arith.addf %40, %11 : vector<16x32xf32>
    %cst_25 = arith.constant dense<0.000000e+00> : vector<8x32xf32>
    %42 = tpu.matmul %2, %8, %cst_25 {dimension_numbers = #tpu.dot_dimension_numbers<[0], [0], [1], [1], [0, 1, 1, 1], [], []>} : vector<8x8xf32>, vector<8x32xf32>, vector<8x32xf32> -> vector<8x32xf32>
    %43 = vector.extract_strided_slice %41 {offsets = [0, 0], sizes = [8, 32], strides = [1, 1]} : vector<16x32xf32> to vector<8x32xf32>
    %44 = arith.addf %43, %42 : vector<8x32xf32>
    %cst_26 = arith.constant 9.99999997E-7 : f32
    %45 = vector.broadcast %cst_26 : f32 to vector<8x32xf32>
    %46 = arith.addf %44, %45 : vector<8x32xf32>
    %cst_27 = arith.constant dense<0.000000e+00> : vector<8xf32>
    %47 = vector.multi_reduction <add>, %46, %cst_27 [1] : vector<8x32xf32> to vector<8xf32>
    %48 = vector.shape_cast %47 : vector<8xf32> to vector<8x1xf32>
    %cst_28 = arith.constant 3.200000e+01 : f32
    %49 = vector.broadcast %cst_28 : f32 to vector<8x1xf32>
    %50 = arith.divf %48, %49 : vector<8x1xf32>
    %51 = vector.broadcast %50 : vector<8x1xf32> to vector<8x32xf32>
    %52 = arith.subf %46, %51 : vector<8x32xf32>
    %53 = arith.mulf %52, %52 : vector<8x32xf32>
    %cst_29 = arith.constant dense<0.000000e+00> : vector<8xf32>
    %54 = vector.multi_reduction <add>, %53, %cst_29 [1] : vector<8x32xf32> to vector<8xf32>
    %55 = vector.shape_cast %54 : vector<8xf32> to vector<8x1xf32>
    %cst_30 = arith.constant 3.200000e+01 : f32
    %56 = vector.broadcast %cst_30 : f32 to vector<8x1xf32>
    %57 = arith.divf %55, %56 : vector<8x1xf32>
    %58 = vector.broadcast %50 : vector<8x1xf32> to vector<8x32xf32>
    %59 = arith.subf %46, %58 : vector<8x32xf32>
    %cst_31 = arith.constant 9.99999974E-6 : f32
    %60 = vector.broadcast %cst_31 : f32 to vector<8x1xf32>
    %61 = arith.addf %57, %60 : vector<8x1xf32>
    %62 = math.rsqrt %61 : vector<8x1xf32>
    %63 = vector.broadcast %62 : vector<8x1xf32> to vector<8x32xf32>
    %64 = arith.mulf %59, %63 : vector<8x32xf32>
    %c0_32 = arith.constant 0 : index
    %c0_33 = arith.constant 0 : index
    %65 = vector.load %arg8[%c0_32, %c0_33] : memref<16x32xf32, #tpu.memory_space<vmem>>, vector<8x32xf32>
    tpu.vector_store %arg8[%c0_32, %c0_33], %64 {strides = array<i32>} : memref<16x32xf32, #tpu.memory_space<vmem>>, vector<8x32xf32>,
    %66 = vector.extract_strided_slice %41 {offsets = [8, 0], sizes = [8, 32], strides = [1, 1]} : vector<16x32xf32> to vector<8x32xf32>
    %cst_34 = arith.constant 9.99999997E-7 : f32
    %67 = vector.broadcast %cst_34 : f32 to vector<8x32xf32>
    %68 = arith.addf %66, %67 : vector<8x32xf32>
    %cst_35 = arith.constant dense<0.000000e+00> : vector<8xf32>
    %69 = vector.multi_reduction <add>, %68, %cst_35 [1] : vector<8x32xf32> to vector<8xf32>
    %70 = vector.shape_cast %69 : vector<8xf32> to vector<8x1xf32>
    %cst_36 = arith.constant 3.200000e+01 : f32
    %71 = vector.broadcast %cst_36 : f32 to vector<8x1xf32>
    %72 = arith.divf %70, %71 : vector<8x1xf32>
    %73 = vector.broadcast %72 : vector<8x1xf32> to vector<8x32xf32>
    %74 = arith.subf %68, %73 : vector<8x32xf32>
    %75 = arith.mulf %74, %74 : vector<8x32xf32>
    %cst_37 = arith.constant dense<0.000000e+00> : vector<8xf32>
    %76 = vector.multi_reduction <add>, %75, %cst_37 [1] : vector<8x32xf32> to vector<8xf32>
    %77 = vector.shape_cast %76 : vector<8xf32> to vector<8x1xf32>
    %cst_38 = arith.constant 3.200000e+01 : f32
    %78 = vector.broadcast %cst_38 : f32 to vector<8x1xf32>
    %79 = arith.divf %77, %78 : vector<8x1xf32>
    %80 = vector.broadcast %72 : vector<8x1xf32> to vector<8x32xf32>
    %81 = arith.subf %68, %80 : vector<8x32xf32>
    %cst_39 = arith.constant 9.99999974E-6 : f32
    %82 = vector.broadcast %cst_39 : f32 to vector<8x1xf32>
    %83 = arith.addf %79, %82 : vector<8x1xf32>
    %84 = math.rsqrt %83 : vector<8x1xf32>
    %85 = vector.broadcast %84 : vector<8x1xf32> to vector<8x32xf32>
    %86 = arith.mulf %81, %85 : vector<8x32xf32>
    %c8 = arith.constant 8 : index
    %c0_40 = arith.constant 0 : index
    %87 = vector.load %arg8[%c8, %c0_40] : memref<16x32xf32, #tpu.memory_space<vmem>>, vector<8x32xf32>
    tpu.vector_store %arg8[%c8, %c0_40], %86 {strides = array<i32>} : memref<16x32xf32, #tpu.memory_space<vmem>>, vector<8x32xf32>,
    return
  }
}

</mosaic_0001>

<llo_original>
// kernel: multi_rela_graph_node_update_forward.1
$region0: #{multi_rela_graph_node_update_forward.1}
  #allocation0 [shape = 'u32[]', space=smem, size = 0x4, offset = 0x4, fixed_abs, tag = 'smem constant byte address 0x4 - core index']
  #allocation1 [shape = 'u32[144,128]{1,0:T(1,128)}', space=vmem, size = 0x12000, scoped, tag = 'internal scratch']
  %s0 = inlined_call_operand.hbm [shape: f32[8,8], index: 0, kind: input, shape index: {}]
  %s1 = inlined_call_operand.vmem [shape: f32[8,8], index: 1, kind: input, shape index: {}]
  %s2 = inlined_call_operand.hbm [shape: f32[16,16], index: 2, kind: input, shape index: {}]
  %s3 = inlined_call_operand.hbm [shape: f32[8,32], index: 3, kind: input, shape index: {}]
  %s4 = inlined_call_operand.hbm [shape: f32[16,32], index: 4, kind: input, shape index: {}]
  %s5 = inlined_call_operand.hbm [shape: f32[32,96], index: 5, kind: input, shape index: {}]
  %s6 = inlined_call_operand.hbm [shape: f32[32,96], index: 6, kind: input, shape index: {}]
  %s7 = inlined_call_operand.hbm [shape: f32[8,32], index: 7, kind: output, shape index: {0}]
  %s8 = inlined_call_operand.hbm [shape: f32[16,32], index: 8, kind: output, shape index: {1}]
  %9 = xla_tuple %s7, %s8
  %s10 = sld [smem:[#allocation0]]
  $region70: #{multi_rela_graph_node_update_forward.1} parent=0
    _
  %s12 = ssub.s32 1, %s10
  %s13 = scalar_select 0, %s12, %s10
  $region1: #{multi_rela_graph_node_update_forward.1} parent=0
    #allocation2 [shape = 'u8[4096]{0}', space=vmem, size = 0x1000, scoped, tag = 'input window, operand 0, single buffered']
    #allocation3 [shape = 's32[1]{0}', space=sflag, size = 0x4, scoped, tag = 'scoped memory for multi_rela_graph_node_update_forward.1']
    #allocation4 [shape = 's32[1]{0}', space=sflag, size = 0x4, scoped, tag = 'scoped memory for multi_rela_graph_node_update_forward.1']
    #allocation5 [shape = 'u8[8192]{0}', space=vmem, size = 0x2000, scoped, tag = 'input window, operand 2, single buffered']
    #allocation6 [shape = 's32[1]{0}', space=sflag, size = 0x4, scoped, tag = 'scoped memory for multi_rela_graph_node_update_forward.1']
    #allocation7 [shape = 'u8[4096]{0}', space=vmem, size = 0x1000, scoped, tag = 'input window, operand 3, single buffered']
    #allocation8 [shape = 'u8[8192]{0}', space=vmem, size = 0x2000, scoped, tag = 'input window, operand 4, single buffered']
    #allocation9 [shape = 's32[1]{0}', space=sflag, size = 0x4, scoped, tag = 'scoped memory for multi_rela_graph_node_update_forward.1']
    #allocation10 [shape = 'u8[16384]{0}', space=vmem, size = 0x4000, scoped, tag = 'input window, operand 5, single buffered']
    #allocation11 [shape = 'u8[16384]{0}', space=vmem, size = 0x4000, scoped, tag = 'input window, operand 6, single buffered']
    #allocation12 [shape = 's32[1]{0}', space=sflag, size = 0x4, scoped, tag = 'scoped memory for multi_rela_graph_node_update_forward.1']
    #allocation13 [shape = 'u8[4096]{0}', space=vmem, size = 0x1000, scoped, tag = 'output window, operand 0, single buffered']
    #allocation14 [shape = 'u8[8192]{0}', space=vmem, size = 0x2000, scoped, tag = 'output window, operand 1, single buffered']
    #allocation15 [shape = 's32[1]{0}', space=sflag, size = 0x4, scoped, tag = 'scoped memory for multi_rela_graph_node_update_forward.1']
    %14 = vsyncpa [#allocation3], 0
    %15 = vsyncpa [#allocation6], 0
    %16 = vsyncpa [#allocation9], 0
    %17 = vsyncpa [#allocation12], 0
    %18 = vsyncpa [#allocation4], 0
    %19 = vsyncpa [#allocation15], 0
    // Predicated region
    $region2: #{multi_rela_graph_node_update_forward.1} parent=1 // pred_check
      _
    $region3: #{multi_rela_graph_node_update_forward.1} parent=1 // pred_check_branch
      %21 = sbr.rel (0) target = $region5
    $region4: #{multi_rela_graph_node_update_forward.1} parent=1 // pred_region
      %s23 = ssub.s32 128, 128
      %24 = vsyncadd [#allocation3], %s23
      %s26 = sshll.u32 [#allocation2], 4
      %s27 = int_to_ptr.vmem [resolvable:$true] %s26
      %29 = dma.hbm_to_vmem [thread:$0]  %s0, 128, %s27, [#allocation3]
    $region5: #{multi_rela_graph_node_update_forward.1} parent=1 // pred_fallthru
      _
    // Predicated region
    $region6: #{multi_rela_graph_node_update_forward.1} parent=1 // pred_check
      _
    $region7: #{multi_rela_graph_node_update_forward.1} parent=1 // pred_check_branch
      %31 = sbr.rel (0) target = $region9
    $region8: #{multi_rela_graph_node_update_forward.1} parent=1 // pred_region
      _
    $region9: #{multi_rela_graph_node_update_forward.1} parent=1 // pred_fallthru
      _
    // Predicated region
    $region10: #{multi_rela_graph_node_update_forward.1} parent=1 // pred_check
      _
    $region11: #{multi_rela_graph_node_update_forward.1} parent=1 // pred_check_branch
      %33 = sbr.rel (0) target = $region13
    $region12: #{multi_rela_graph_node_update_forward.1} parent=1 // pred_region
      %s35 = ssub.s32 256, 256
      %36 = vsyncadd [#allocation6], %s35
      %s37 = sshll.u32 [#allocation5], 4
      %s38 = int_to_ptr.vmem [resolvable:$true] %s37
      %43 = dma.hbm_to_vmem [thread:$0]  %s2, 256, %s38, [#allocation6], 128, 128, 8
    $region13: #{multi_rela_graph_node_update_forward.1} parent=1 // pred_fallthru
      _
    // Predicated region
    $region14: #{multi_rela_graph_node_update_forward.1} parent=1 // pred_check
      _
    $region15: #{multi_rela_graph_node_update_forward.1} parent=1 // pred_check_branch
      %45 = sbr.rel (0) target = $region17
    $region16: #{multi_rela_graph_node_update_forward.1} parent=1 // pred_region
      %s47 = ssub.s32 128, 128
      %48 = vsyncadd [#allocation6], %s47
      %s50 = sshll.u32 [#allocation7], 4
      %s51 = int_to_ptr.vmem [resolvable:$true] %s50
      %53 = dma.hbm_to_vmem [thread:$0]  %s3, 128, %s51, [#allocation6]
    $region17: #{multi_rela_graph_node_update_forward.1} parent=1 // pred_fallthru
      _
    // Predicated region
    $region18: #{multi_rela_graph_node_update_forward.1} parent=1 // pred_check
      _
    $region19: #{multi_rela_graph_node_update_forward.1} parent=1 // pred_check_branch
      %55 = sbr.rel (0) target = $region21
    $region20: #{multi_rela_graph_node_update_forward.1} parent=1 // pred_region
      %s57 = ssub.s32 256, 256
      %58 = vsyncadd [#allocation9], %s57
      %s59 = sshll.u32 [#allocation8], 4
      %s60 = int_to_ptr.vmem [resolvable:$true] %s59
      %65 = dma.hbm_to_vmem [thread:$0]  %s4, 256, %s60, [#allocation9], 128, 128, 8
    $region21: #{multi_rela_graph_node_update_forward.1} parent=1 // pred_fallthru
      _
    // Predicated region
    $region22: #{multi_rela_graph_node_update_forward.1} parent=1 // pred_check
      _
    $region23: #{multi_rela_graph_node_update_forward.1} parent=1 // pred_check_branch
      %67 = sbr.rel (0) target = $region25
    $region24: #{multi_rela_graph_node_update_forward.1} parent=1 // pred_region
      %s69 = ssub.s32 512, 512
      %70 = vsyncadd [#allocation9], %s69
      %s71 = sshll.u32 [#allocation10], 4
      %s72 = int_to_ptr.vmem [resolvable:$true] %s71
      %77 = dma.hbm_to_vmem [thread:$0]  %s5, 512, %s72, [#allocation9], 128, 128, 8
    $region25: #{multi_rela_graph_node_update_forward.1} parent=1 // pred_fallthru
      _
    // Predicated region
    $region26: #{multi_rela_graph_node_update_forward.1} parent=1 // pred_check
      _
    $region27: #{multi_rela_graph_node_update_forward.1} parent=1 // pred_check_branch
      %79 = sbr.rel (0) target = $region29
    $region28: #{multi_rela_graph_node_update_forward.1} parent=1 // pred_region
      %s81 = ssub.s32 512, 512
      %82 = vsyncadd [#allocation12], %s81
      %s83 = sshll.u32 [#allocation11], 4
      %s84 = int_to_ptr.vmem [resolvable:$true] %s83
      %89 = dma.hbm_to_vmem [thread:$0]  %s6, 512, %s84, [#allocation12], 128, 128, 8
    $region29: #{multi_rela_graph_node_update_forward.1} parent=1 // pred_fallthru
      _
    // Predicated region
    $region30: #{multi_rela_graph_node_update_forward.1} parent=1 // pred_check
      _
    $region31: #{multi_rela_graph_node_update_forward.1} parent=1 // pred_check_branch
      %91 = sbr.rel (0) target = $region33
    $region32: #{multi_rela_graph_node_update_forward.1} parent=1 // pred_region
      %92 = dma.done [#allocation3], 128
    $region33: #{multi_rela_graph_node_update_forward.1} parent=1 // pred_fallthru
      _
    // Predicated region
    $region34: #{multi_rela_graph_node_update_forward.1} parent=1 // pred_check
      _
    $region35: #{multi_rela_graph_node_update_forward.1} parent=1 // pred_check_branch
      %94 = sbr.rel (0) target = $region37
    $region36: #{multi_rela_graph_node_update_forward.1} parent=1 // pred_region
      %95 = dma.done [#allocation6], 256
    $region37: #{multi_rela_graph_node_update_forward.1} parent=1 // pred_fallthru
      _
    // Predicated region
    $region38: #{multi_rela_graph_node_update_forward.1} parent=1 // pred_check
      _
    $region39: #{multi_rela_graph_node_update_forward.1} parent=1 // pred_check_branch
      %97 = sbr.rel (0) target = $region41
    $region40: #{multi_rela_graph_node_update_forward.1} parent=1 // pred_region
      %98 = dma.done [#allocation6], 128
    $region41: #{multi_rela_graph_node_update_forward.1} parent=1 // pred_fallthru
      _
    // Predicated region
    $region42: #{multi_rela_graph_node_update_forward.1} parent=1 // pred_check
      _
    $region43: #{multi_rela_graph_node_update_forward.1} parent=1 // pred_check_branch
      %100 = sbr.rel (0) target = $region45
    $region44: #{multi_rela_graph_node_update_forward.1} parent=1 // pred_region
      %101 = dma.done [#allocation9], 256
    $region45: #{multi_rela_graph_node_update_forward.1} parent=1 // pred_fallthru
      _
    // Predicated region
    $region46: #{multi_rela_graph_node_update_forward.1} parent=1 // pred_check
      _
    $region47: #{multi_rela_graph_node_update_forward.1} parent=1 // pred_check_branch
      %103 = sbr.rel (0) target = $region49
    $region48: #{multi_rela_graph_node_update_forward.1} parent=1 // pred_region
      %104 = dma.done [#allocation9], 512
    $region49: #{multi_rela_graph_node_update_forward.1} parent=1 // pred_fallthru
      _
    // Predicated region
    $region50: #{multi_rela_graph_node_update_forward.1} parent=1 // pred_check
      _
    $region51: #{multi_rela_graph_node_update_forward.1} parent=1 // pred_check_branch
      %106 = sbr.rel (0) target = $region53
    $region52: #{multi_rela_graph_node_update_forward.1} parent=1 // pred_region
      %107 = dma.done [#allocation12], 512
    $region53: #{multi_rela_graph_node_update_forward.1} parent=1 // pred_fallthru
      _
    %v108 = vld [vmem:[#allocation7] sm:$0xff]
    %v109 = vld [vmem:[#allocation8] sm:$0xff]
    %v110 = vld [vmem:[#allocation8 + $0x8] sm:$0xff]
    %v111 = vld [vmem:[%s1] sm:$0xff]
    %v112 = vld [vmem:[#allocation10] sm:$0xff]
    %v113 = vld [vmem:[#allocation10 + $0x8] sm:$0xff]
    %v114 = vld [vmem:[#allocation10 + $0x10] sm:$0xff]
    %v115 = vld [vmem:[#allocation10 + $0x18] sm:$0xff]
    %vm116 = vcmask 261120
    %v118 = vsel %vm116, %v108, 0
    %120 = vmatprep.subr.mxu0 0.0
    %121 = vmatpush1.msra.mxu0 0.0
    %122 = vmatprep.subr.mxu0 0.0
    %123 = vmatpush1.msra.mxu0 0.0
    %124 = vmatprep.subr.mxu0 0.0
    %125 = vmatpush1.msra.mxu0 0.0
    %126 = vmatprep.subr.mxu0 0.0
    %127 = vmatpush1.msra.mxu0 0.0
    %128 = vmatprep.subr.mxu0 0.0
    %129 = vmatpush1.msra.mxu0 0.0
    %130 = vmatprep.subr.mxu0 0.0
    %131 = vmatpush1.msra.mxu0 0.0
    %132 = vmatprep.subr.mxu0 0.0
    %133 = vmatpush1.msra.mxu0 0.0
    %134 = vmatprep.subr.mxu0 0.0
    %135 = vmatpush1.msra.mxu0 0.0
    %136 = vmatprep.subr.mxu0 0.0
    %137 = vmatpush1.msra.mxu0 0.0
    %138 = vmatprep.subr.mxu0 0.0
    %139 = vmatpush1.msra.mxu0 0.0
    %140 = vmatprep.subr.mxu0 0.0
    %141 = vmatpush1.msra.mxu0 0.0
    %142 = vmatprep.subr.mxu0 0.0
    %143 = vmatpush1.msra.mxu0 0.0
    %144 = vmatprep.subr.mxu0 0.0
    %145 = vmatpush1.msra.mxu0 %v115
    %146 = vmatprep.subr.mxu0 0.0
    %147 = vmatpush1.msra.mxu0 %v114
    %148 = vmatprep.subr.mxu0 0.0
    %149 = vmatpush1.msra.mxu0 %v113
    %150 = vmatprep.subr.mxu0 0.0
    %151 = vmatpush1.msra.mxu0 %v112
    %152 = vmatprep.subr.mxu0 0.0
    %153 = vmatpush2.msra.mxu0 0.0
    %154 = vmatprep.subr.mxu0 0.0
    %155 = vmatpush2.msra.mxu0 0.0
    %156 = vmatprep.subr.mxu0 0.0
    %157 = vmatpush2.msra.mxu0 0.0
    %158 = vmatprep.subr.mxu0 0.0
    %159 = vmatpush2.msra.mxu0 0.0
    %160 = vmatprep.subr.mxu0 0.0
    %161 = vmatpush2.msra.mxu0 0.0
    %162 = vmatprep.subr.mxu0 0.0
    %163 = vmatpush2.msra.mxu0 0.0
    %164 = vmatprep.subr.mxu0 0.0
    %165 = vmatpush2.msra.mxu0 0.0
    %166 = vmatprep.subr.mxu0 0.0
    %167 = vmatpush2.msra.mxu0 0.0
    %168 = vmatprep.subr.mxu0 0.0
    %169 = vmatpush2.msra.mxu0 0.0
    %170 = vmatprep.subr.mxu0 0.0
    %171 = vmatpush2.msra.mxu0 0.0
    %172 = vmatprep.subr.mxu0 0.0
    %173 = vmatpush2.msra.mxu0 0.0
    %174 = vmatprep.subr.mxu0 0.0
    %175 = vmatpush2.msra.mxu0 0.0
    %176 = vmatprep.subr.mxu0 0.0
    %177 = vmatpush2.msra.mxu0 0.0
    %178 = vmatprep.subr.mxu0 0.0
    %179 = vmatpush2.msra.mxu0 0.0
    %180 = vmatprep.subr.mxu0 0.0
    %181 = vmatpush2.msra.mxu0 0.0
    %182 = vmatprep.subr.mxu0 0.0
    %183 = vmatpush2.msra.mxu0 0.0
    %184 = vmatprep.mubr.f32.mxu0 0.0
    %185 = vmatmul.mubr.f32.gmra.mxu0 %v118
    %v186 = vpop.f32.mrf.mxu0
    %v187 = vadd.f32 0.0, %v186
    %v188 = vpop.f32.mrf.mxu0
    %189 = vdwg.mxu0
    %v190 = vld [vmem:[#allocation11] sm:$0xff]
    %v191 = vld [vmem:[#allocation11 + $0x8] sm:$0xff]
    %v192 = vld [vmem:[#allocation11 + $0x10] sm:$0xff]
    %v193 = vld [vmem:[#allocation11 + $0x18] sm:$0xff]
    %v195 = vsel %vm116, %v109, 0
    %v198 = vsel %vm116, %v110, 0
    %200 = vmatprep.subr.mxu0 0.0
    %201 = vmatpush1.msra.mxu0 0.0
    %202 = vmatprep.subr.mxu0 0.0
    %203 = vmatpush1.msra.mxu0 0.0
    %204 = vmatprep.subr.mxu0 0.0
    %205 = vmatpush1.msra.mxu0 0.0
    %206 = vmatprep.subr.mxu0 0.0
    %207 = vmatpush1.msra.mxu0 0.0
    %208 = vmatprep.subr.mxu0 0.0
    %209 = vmatpush1.msra.mxu0 0.0
    %210 = vmatprep.subr.mxu0 0.0
    %211 = vmatpush1.msra.mxu0 0.0
    %212 = vmatprep.subr.mxu0 0.0
    %213 = vmatpush1.msra.mxu0 0.0
    %214 = vmatprep.subr.mxu0 0.0
    %215 = vmatpush1.msra.mxu0 0.0
    %216 = vmatprep.subr.mxu0 0.0
    %217 = vmatpush1.msra.mxu0 0.0
    %218 = vmatprep.subr.mxu0 0.0
    %219 = vmatpush1.msra.mxu0 0.0
    %220 = vmatprep.subr.mxu0 0.0
    %221 = vmatpush1.msra.mxu0 0.0
    %222 = vmatprep.subr.mxu0 0.0
    %223 = vmatpush1.msra.mxu0 0.0
    %224 = vmatprep.subr.mxu0 0.0
    %225 = vmatpush1.msra.mxu0 %v193
    %226 = vmatprep.subr.mxu0 0.0
    %227 = vmatpush1.msra.mxu0 %v192
    %228 = vmatprep.subr.mxu0 0.0
    %229 = vmatpush1.msra.mxu0 %v191
    %230 = vmatprep.subr.mxu0 0.0
    %231 = vmatpush1.msra.mxu0 %v190
    %232 = vmatprep.subr.mxu0 0.0
    %233 = vmatpush2.msra.mxu0 0.0
    %234 = vmatprep.subr.mxu0 0.0
    %235 = vmatpush2.msra.mxu0 0.0
    %236 = vmatprep.subr.mxu0 0.0
    %237 = vmatpush2.msra.mxu0 0.0
    %238 = vmatprep.subr.mxu0 0.0
    %239 = vmatpush2.msra.mxu0 0.0
    %240 = vmatprep.subr.mxu0 0.0
    %241 = vmatpush2.msra.mxu0 0.0
    %242 = vmatprep.subr.mxu0 0.0
    %243 = vmatpush2.msra.mxu0 0.0
    %244 = vmatprep.subr.mxu0 0.0
    %245 = vmatpush2.msra.mxu0 0.0
    %246 = vmatprep.subr.mxu0 0.0
    %247 = vmatpush2.msra.mxu0 0.0
    %248 = vmatprep.subr.mxu0 0.0
    %249 = vmatpush2.msra.mxu0 0.0
    %250 = vmatprep.subr.mxu0 0.0
    %251 = vmatpush2.msra.mxu0 0.0
    %252 = vmatprep.subr.mxu0 0.0
    %253 = vmatpush2.msra.mxu0 0.0
    %254 = vmatprep.subr.mxu0 0.0
    %255 = vmatpush2.msra.mxu0 0.0
    %256 = vmatprep.subr.mxu0 0.0
    %257 = vmatpush2.msra.mxu0 0.0
    %258 = vmatprep.subr.mxu0 0.0
    %259 = vmatpush2.msra.mxu0 0.0
    %260 = vmatprep.subr.mxu0 0.0
    %261 = vmatpush2.msra.mxu0 0.0
    %262 = vmatprep.subr.mxu0 0.0
    %263 = vmatpush2.msra.mxu0 0.0
    %264 = vmatprep.mubr.f32.mxu0 0.0
    %265 = vmatmul.mubr.f32.gmra.mxu0 %v195
    %v266 = vpop.f32.mrf.mxu0
    %v267 = vadd.f32 0.0, %v266
    %v268 = vpop.f32.mrf.mxu0
    %269 = vmatprep.mubr.f32.mxu0 0.0
    %270 = vmatmul.mubr.f32.gmra.mxu0 %v198
    %v271 = vpop.f32.mrf.mxu0
    %v272 = vadd.f32 0.0, %v271
    %v273 = vpop.f32.mrf.mxu0
    %274 = vdwg.mxu0
    %v275 = vld [vmem:[#allocation2] sm:$0xff]
    %277 = vrot.lane.b32.xlu0 %v267, 64
    %v278 = vpop.permute.xlu0 %277
    %vm280 = vcmask 64512
    %v282 = vsel %vm280, %v111, 0
    %284 = vmatprep.subr.mxu0 0.0
    %285 = vmatpush1.msra.mxu0 0.0
    %286 = vmatprep.subr.mxu0 0.0
    %287 = vmatpush1.msra.mxu0 0.0
    %288 = vmatprep.subr.mxu0 0.0
    %289 = vmatpush1.msra.mxu0 0.0
    %290 = vmatprep.subr.mxu0 0.0
    %291 = vmatpush1.msra.mxu0 0.0
    %292 = vmatprep.subr.mxu0 0.0
    %293 = vmatpush1.msra.mxu0 0.0
    %294 = vmatprep.subr.mxu0 0.0
    %295 = vmatpush1.msra.mxu0 0.0
    %296 = vmatprep.subr.mxu0 0.0
    %297 = vmatpush1.msra.mxu0 0.0
    %298 = vmatprep.subr.mxu0 0.0
    %299 = vmatpush1.msra.mxu0 0.0
    %300 = vmatprep.subr.mxu0 0.0
    %301 = vmatpush1.msra.mxu0 0.0
    %302 = vmatprep.subr.mxu0 0.0
    %303 = vmatpush1.msra.mxu0 0.0
    %304 = vmatprep.subr.mxu0 0.0
    %305 = vmatpush1.msra.mxu0 0.0
    %306 = vmatprep.subr.mxu0 0.0
    %307 = vmatpush1.msra.mxu0 0.0
    %308 = vmatprep.subr.mxu0 0.0
    %309 = vmatpush1.msra.mxu0 0.0
    %310 = vmatprep.subr.mxu0 0.0
    %311 = vmatpush1.msra.mxu0 0.0
    %312 = vmatprep.subr.mxu0 0.0
    %313 = vmatpush1.msra.mxu0 0.0
    %314 = vmatprep.subr.mxu0 0.0
    %315 = vmatpush1.msra.mxu0 %v278
    %316 = vmatprep.subr.mxu0 0.0
    %317 = vmatpush2.msra.mxu0 0.0
    %318 = vmatprep.subr.mxu0 0.0
    %319 = vmatpush2.msra.mxu0 0.0
    %320 = vmatprep.subr.mxu0 0.0
    %321 = vmatpush2.msra.mxu0 0.0
    %322 = vmatprep.subr.mxu0 0.0
    %323 = vmatpush2.msra.mxu0 0.0
    %324 = vmatprep.subr.mxu0 0.0
    %325 = vmatpush2.msra.mxu0 0.0
    %326 = vmatprep.subr.mxu0 0.0
    %327 = vmatpush2.msra.mxu0 0.0
    %328 = vmatprep.subr.mxu0 0.0
    %329 = vmatpush2.msra.mxu0 0.0
    %330 = vmatprep.subr.mxu0 0.0
    %331 = vmatpush2.msra.mxu0 0.0
    %332 = vmatprep.subr.mxu0 0.0
    %333 = vmatpush2.msra.mxu0 0.0
    %334 = vmatprep.subr.mxu0 0.0
    %335 = vmatpush2.msra.mxu0 0.0
    %336 = vmatprep.subr.mxu0 0.0
    %337 = vmatpush2.msra.mxu0 0.0
    %338 = vmatprep.subr.mxu0 0.0
    %339 = vmatpush2.msra.mxu0 0.0
    %340 = vmatprep.subr.mxu0 0.0
    %341 = vmatpush2.msra.mxu0 0.0
    %342 = vmatprep.subr.mxu0 0.0
    %343 = vmatpush2.msra.mxu0 0.0
    %344 = vmatprep.subr.mxu0 0.0
    %345 = vmatpush2.msra.mxu0 0.0
    %346 = vmatprep.subr.mxu0 0.0
    %347 = vmatpush2.msra.mxu0 0.0
    %348 = vmatprep.mubr.f32.mxu0 0.0
    %349 = vmatmul.mubr.f32.gmra.mxu0 %v282
    %v350 = vpop.f32.mrf.mxu0
    %v351 = vadd.f32 0.0, %v350
    %v352 = vpop.f32.mrf.mxu0
    %353 = vdwg.mxu0
    %v355 = vsel %vm280, %v275, 0
    %357 = vmatprep.subr.mxu0 0.0
    %358 = vmatpush1.msra.mxu0 0.0
    %359 = vmatprep.subr.mxu0 0.0
    %360 = vmatpush1.msra.mxu0 0.0
    %361 = vmatprep.subr.mxu0 0.0
    %362 = vmatpush1.msra.mxu0 0.0
    %363 = vmatprep.subr.mxu0 0.0
    %364 = vmatpush1.msra.mxu0 0.0
    %365 = vmatprep.subr.mxu0 0.0
    %366 = vmatpush1.msra.mxu0 0.0
    %367 = vmatprep.subr.mxu0 0.0
    %368 = vmatpush1.msra.mxu0 0.0
    %369 = vmatprep.subr.mxu0 0.0
    %370 = vmatpush1.msra.mxu0 0.0
    %371 = vmatprep.subr.mxu0 0.0
    %372 = vmatpush1.msra.mxu0 0.0
    %373 = vmatprep.subr.mxu0 0.0
    %374 = vmatpush1.msra.mxu0 0.0
    %375 = vmatprep.subr.mxu0 0.0
    %376 = vmatpush1.msra.mxu0 0.0
    %377 = vmatprep.subr.mxu0 0.0
    %378 = vmatpush1.msra.mxu0 0.0
    %379 = vmatprep.subr.mxu0 0.0
    %380 = vmatpush1.msra.mxu0 0.0
    %381 = vmatprep.subr.mxu0 0.0
    %382 = vmatpush1.msra.mxu0 0.0
    %383 = vmatprep.subr.mxu0 0.0
    %384 = vmatpush1.msra.mxu0 0.0
    %385 = vmatprep.subr.mxu0 0.0
    %386 = vmatpush1.msra.mxu0 0.0
    %387 = vmatprep.subr.mxu0 0.0
    %388 = vmatpush1.msra.mxu0 %v187
    %389 = vmatprep.subr.mxu0 0.0
    %390 = vmatpush2.msra.mxu0 0.0
    %391 = vmatprep.subr.mxu0 0.0
    %392 = vmatpush2.msra.mxu0 0.0
    %393 = vmatprep.subr.mxu0 0.0
    %394 = vmatpush2.msra.mxu0 0.0
    %395 = vmatprep.subr.mxu0 0.0
    %396 = vmatpush2.msra.mxu0 0.0
    %397 = vmatprep.subr.mxu0 0.0
    %398 = vmatpush2.msra.mxu0 0.0
    %399 = vmatprep.subr.mxu0 0.0
    %400 = vmatpush2.msra.mxu0 0.0
    %401 = vmatprep.subr.mxu0 0.0
    %402 = vmatpush2.msra.mxu0 0.0
    %403 = vmatprep.subr.mxu0 0.0
    %404 = vmatpush2.msra.mxu0 0.0
    %405 = vmatprep.subr.mxu0 0.0
    %406 = vmatpush2.msra.mxu0 0.0
    %407 = vmatprep.subr.mxu0 0.0
    %408 = vmatpush2.msra.mxu0 0.0
    %409 = vmatprep.subr.mxu0 0.0
    %410 = vmatpush2.msra.mxu0 0.0
    %411 = vmatprep.subr.mxu0 0.0
    %412 = vmatpush2.msra.mxu0 0.0
    %413 = vmatprep.subr.mxu0 0.0
    %414 = vmatpush2.msra.mxu0 0.0
    %415 = vmatprep.subr.mxu0 0.0
    %416 = vmatpush2.msra.mxu0 0.0
    %417 = vmatprep.subr.mxu0 0.0
    %418 = vmatpush2.msra.mxu0 0.0
    %419 = vmatprep.subr.mxu0 0.0
    %420 = vmatpush2.msra.mxu0 0.0
    %421 = vmatprep.mubr.f32.mxu0 0.0
    %422 = vmatmul.mubr.f32.gmra.mxu0 %v355
    %v423 = vpop.f32.mrf.mxu0
    %v424 = vadd.f32 %v351, %v423
    %v425 = vpop.f32.mrf.mxu0
    %426 = vdwg.mxu0
    %428 = vrot.lane.b32.xlu0 %v187, 64
    %v429 = vpop.permute.xlu0 %428
    %v431 = vadd.f32 %v424, %v429
    %v432 = vadd.f32 %v431, 1e-06
    %v433 = vsel %vm116, %v432, 0.0
    %434 = vadd.xlane.f32.xlu0 %v433
    %v435 = vpop.xlane.xlu0 %434
    %v436 = vrcp.pop 32.0
    %v437 = vmul.f32 %v435, %v436
    %v438 = vsub.f32 %v432, %v437
    %v439 = vmul.f32 %v438, %v438
    %v440 = vsel %vm116, %v439, 0.0
    %441 = vadd.xlane.f32.xlu0 %v440
    %v442 = vpop.xlane.xlu0 %441
    %v443 = vmul.f32 %v442, %v436
    %v444 = vadd.f32 %v443, 1e-05
    %v445 = vrsqrt.pop %v444
    %v446 = vmul.f32 %v438, %v445
    %447 = vst.msk [vmem:[#allocation13] sm:$0xff] %vm116, %v446
    %v448 = vld [vmem:[#allocation5] sm:$0xff]
    %v449 = vld [vmem:[#allocation5 + $0x8] sm:$0xff]
    %451 = vrot.lane.b32.xlu0 %v267, 96
    %v452 = vpop.permute.xlu0 %451
    %453 = vrot.lane.b32.xlu0 %v272, 96
    %v454 = vpop.permute.xlu0 %453
    %vm457 = vcmask 130048
    %v459 = vsel %vm457, %v448, 0
    %v462 = vsel %vm457, %v449, 0
    %464 = vmatprep.subr.mxu0 0.0
    %465 = vmatpush1.msra.mxu0 0.0
    %466 = vmatprep.subr.mxu0 0.0
    %467 = vmatpush1.msra.mxu0 0.0
    %468 = vmatprep.subr.mxu0 0.0
    %469 = vmatpush1.msra.mxu0 0.0
    %470 = vmatprep.subr.mxu0 0.0
    %471 = vmatpush1.msra.mxu0 0.0
    %472 = vmatprep.subr.mxu0 0.0
    %473 = vmatpush1.msra.mxu0 0.0
    %474 = vmatprep.subr.mxu0 0.0
    %475 = vmatpush1.msra.mxu0 0.0
    %476 = vmatprep.subr.mxu0 0.0
    %477 = vmatpush1.msra.mxu0 0.0
    %478 = vmatprep.subr.mxu0 0.0
    %479 = vmatpush1.msra.mxu0 0.0
    %480 = vmatprep.subr.mxu0 0.0
    %481 = vmatpush1.msra.mxu0 0.0
    %482 = vmatprep.subr.mxu0 0.0
    %483 = vmatpush1.msra.mxu0 0.0
    %484 = vmatprep.subr.mxu0 0.0
    %485 = vmatpush1.msra.mxu0 0.0
    %486 = vmatprep.subr.mxu0 0.0
    %487 = vmatpush1.msra.mxu0 0.0
    %488 = vmatprep.subr.mxu0 0.0
    %489 = vmatpush1.msra.mxu0 0.0
    %490 = vmatprep.subr.mxu0 0.0
    %491 = vmatpush1.msra.mxu0 0.0
    %492 = vmatprep.subr.mxu0 0.0
    %493 = vmatpush1.msra.mxu0 %v272
    %494 = vmatprep.subr.mxu0 0.0
    %495 = vmatpush1.msra.mxu0 %v267
    %496 = vmatprep.subr.mxu0 0.0
    %497 = vmatpush2.msra.mxu0 0.0
    %498 = vmatprep.subr.mxu0 0.0
    %499 = vmatpush2.msra.mxu0 0.0
    %500 = vmatprep.subr.mxu0 0.0
    %501 = vmatpush2.msra.mxu0 0.0
    %502 = vmatprep.subr.mxu0 0.0
    %503 = vmatpush2.msra.mxu0 0.0
    %504 = vmatprep.subr.mxu0 0.0
    %505 = vmatpush2.msra.mxu0 0.0
    %506 = vmatprep.subr.mxu0 0.0
    %507 = vmatpush2.msra.mxu0 0.0
    %508 = vmatprep.subr.mxu0 0.0
    %509 = vmatpush2.msra.mxu0 0.0
    %510 = vmatprep.subr.mxu0 0.0
    %511 = vmatpush2.msra.mxu0 0.0
    %512 = vmatprep.subr.mxu0 0.0
    %513 = vmatpush2.msra.mxu0 0.0
    %514 = vmatprep.subr.mxu0 0.0
    %515 = vmatpush2.msra.mxu0 0.0
    %516 = vmatprep.subr.mxu0 0.0
    %517 = vmatpush2.msra.mxu0 0.0
    %518 = vmatprep.subr.mxu0 0.0
    %519 = vmatpush2.msra.mxu0 0.0
    %520 = vmatprep.subr.mxu0 0.0
    %521 = vmatpush2.msra.mxu0 0.0
    %522 = vmatprep.subr.mxu0 0.0
    %523 = vmatpush2.msra.mxu0 0.0
    %524 = vmatprep.subr.mxu0 0.0
    %525 = vmatpush2.msra.mxu0 0.0
    %526 = vmatprep.subr.mxu0 0.0
    %527 = vmatpush2.msra.mxu0 0.0
    %528 = vmatprep.mubr.f32.mxu0 0.0
    %529 = vmatmul.mubr.f32.gmra.mxu0 %v459
    %v530 = vpop.f32.mrf.mxu0
    %v531 = vadd.f32 %v452, %v530
    %v532 = vpop.f32.mrf.mxu0
    %533 = vmatprep.mubr.f32.mxu0 0.0
    %534 = vmatmul.mubr.f32.gmra.mxu0 %v462
    %v535 = vpop.f32.mrf.mxu0
    %v536 = vadd.f32 %v454, %v535
    %v537 = vpop.f32.mrf.mxu0
    %538 = vdwg.mxu0
    %539 = vxpose.xlu0.b32.start [1/16] %v111, 128
    %540 = vxpose.xlu0.b32.cont [2/16] 0.0, 128
    %541 = vxpose.xlu0.b32.cont [3/16] 0.0, 128
    %542 = vxpose.xlu0.b32.cont [4/16] 0.0, 128
    %543 = vxpose.xlu0.b32.cont [5/16] 0.0, 128
    %544 = vxpose.xlu0.b32.cont [6/16] 0.0, 128
    %545 = vxpose.xlu0.b32.cont [7/16] 0.0, 128
    %546 = vxpose.xlu0.b32.cont [8/16] 0.0, 128
    %547 = vxpose.xlu0.b32.cont [9/16] 0.0, 128
    %548 = vxpose.xlu0.b32.cont [10/16] 0.0, 128
    %549 = vxpose.xlu0.b32.cont [11/16] 0.0, 128
    %550 = vxpose.xlu0.b32.cont [12/16] 0.0, 128
    %551 = vxpose.xlu0.b32.cont [13/16] 0.0, 128
    %552 = vxpose.xlu0.b32.cont [14/16] 0.0, 128
    %553 = vxpose.xlu0.b32.cont [15/16] 0.0, 128
    %554 = vxpose.xlu0.b32.end [16/16] 0.0, 128
    %v555 = vpop.trf.xlu0
    %v556 = vpop.trf.xlu0
    %v557 = vpop.trf.xlu0
    %v558 = vpop.trf.xlu0
    %v559 = vpop.trf.xlu0
    %v560 = vpop.trf.xlu0
    %v561 = vpop.trf.xlu0
    %v562 = vpop.trf.xlu0
    %v563 = vpop.trf.xlu0
    %v564 = vpop.trf.xlu0
    %v565 = vpop.trf.xlu0
    %v566 = vpop.trf.xlu0
    %v567 = vpop.trf.xlu0
    %v568 = vpop.trf.xlu0
    %v569 = vpop.trf.xlu0
    %v570 = vpop.trf.xlu0
    %571 = vrot.lane.b32.xlu0 %v187, 96
    %v572 = vpop.permute.xlu0 %571
    %v575 = vsel %vm280, %v555, 0
    %577 = vmatprep.subr.mxu0 0.0
    %578 = vmatpush1.msra.mxu0 0.0
    %579 = vmatprep.subr.mxu0 0.0
    %580 = vmatpush1.msra.mxu0 0.0
    %581 = vmatprep.subr.mxu0 0.0
    %582 = vmatpush1.msra.mxu0 0.0
    %583 = vmatprep.subr.mxu0 0.0
    %584 = vmatpush1.msra.mxu0 0.0
    %585 = vmatprep.subr.mxu0 0.0
    %586 = vmatpush1.msra.mxu0 0.0
    %587 = vmatprep.subr.mxu0 0.0
    %588 = vmatpush1.msra.mxu0 0.0
    %589 = vmatprep.subr.mxu0 0.0
    %590 = vmatpush1.msra.mxu0 0.0
    %591 = vmatprep.subr.mxu0 0.0
    %592 = vmatpush1.msra.mxu0 0.0
    %593 = vmatprep.subr.mxu0 0.0
    %594 = vmatpush1.msra.mxu0 0.0
    %595 = vmatprep.subr.mxu0 0.0
    %596 = vmatpush1.msra.mxu0 0.0
    %597 = vmatprep.subr.mxu0 0.0
    %598 = vmatpush1.msra.mxu0 0.0
    %599 = vmatprep.subr.mxu0 0.0
    %600 = vmatpush1.msra.mxu0 0.0
    %601 = vmatprep.subr.mxu0 0.0
    %602 = vmatpush1.msra.mxu0 0.0
    %603 = vmatprep.subr.mxu0 0.0
    %604 = vmatpush1.msra.mxu0 0.0
    %605 = vmatprep.subr.mxu0 0.0
    %606 = vmatpush1.msra.mxu0 0.0
    %607 = vmatprep.subr.mxu0 0.0
    %608 = vmatpush1.msra.mxu0 %v572
    %609 = vmatprep.subr.mxu0 0.0
    %610 = vmatpush2.msra.mxu0 0.0
    %611 = vmatprep.subr.mxu0 0.0
    %612 = vmatpush2.msra.mxu0 0.0
    %613 = vmatprep.subr.mxu0 0.0
    %614 = vmatpush2.msra.mxu0 0.0
    %615 = vmatprep.subr.mxu0 0.0
    %616 = vmatpush2.msra.mxu0 0.0
    %617 = vmatprep.subr.mxu0 0.0
    %618 = vmatpush2.msra.mxu0 0.0
    %619 = vmatprep.subr.mxu0 0.0
    %620 = vmatpush2.msra.mxu0 0.0
    %621 = vmatprep.subr.mxu0 0.0
    %622 = vmatpush2.msra.mxu0 0.0
    %623 = vmatprep.subr.mxu0 0.0
    %624 = vmatpush2.msra.mxu0 0.0
    %625 = vmatprep.subr.mxu0 0.0
    %626 = vmatpush2.msra.mxu0 0.0
    %627 = vmatprep.subr.mxu0 0.0
    %628 = vmatpush2.msra.mxu0 0.0
    %629 = vmatprep.subr.mxu0 0.0
    %630 = vmatpush2.msra.mxu0 0.0
    %631 = vmatprep.subr.mxu0 0.0
    %632 = vmatpush2.msra.mxu0 0.0
    %633 = vmatprep.subr.mxu0 0.0
    %634 = vmatpush2.msra.mxu0 0.0
    %635 = vmatprep.subr.mxu0 0.0
    %636 = vmatpush2.msra.mxu0 0.0
    %637 = vmatprep.subr.mxu0 0.0
    %638 = vmatpush2.msra.mxu0 0.0
    %639 = vmatprep.subr.mxu0 0.0
    %640 = vmatpush2.msra.mxu0 0.0
    %641 = vmatprep.mubr.f32.mxu0 0.0
    %642 = vmatmul.mubr.f32.gmra.mxu0 %v575
    %v643 = vpop.f32.mrf.mxu0
    %v644 = vadd.f32 0.0, %v643
    %v645 = vpop.f32.mrf.mxu0
    %646 = vdwg.mxu0
    %v647 = vadd.f32 %v531, %v644
    %v648 = vadd.f32 %v647, 1e-06
    %v649 = vsel %vm116, %v648, 0.0
    %650 = vadd.xlane.f32.xlu0 %v649
    %v651 = vpop.xlane.xlu0 %650
    %v652 = vmul.f32 %v651, %v436
    %v653 = vsub.f32 %v648, %v652
    %v654 = vmul.f32 %v653, %v653
    %v655 = vsel %vm116, %v654, 0.0
    %656 = vadd.xlane.f32.xlu0 %v655
    %v657 = vpop.xlane.xlu0 %656
    %v658 = vmul.f32 %v657, %v436
    %v659 = vadd.f32 %v658, 1e-05
    %v660 = vrsqrt.pop %v659
    %v661 = vmul.f32 %v653, %v660
    %662 = vst.msk [vmem:[#allocation14] sm:$0xff] %vm116, %v661
    %v663 = vadd.f32 %v536, 1e-06
    %v664 = vsel %vm116, %v663, 0.0
    %665 = vadd.xlane.f32.xlu0 %v664
    %v666 = vpop.xlane.xlu0 %665
    %v667 = vmul.f32 %v666, %v436
    %v668 = vsub.f32 %v663, %v667
    %v669 = vmul.f32 %v668, %v668
    %v670 = vsel %vm116, %v669, 0.0
    %671 = vadd.xlane.f32.xlu0 %v670
    %v672 = vpop.xlane.xlu0 %671
    %v673 = vmul.f32 %v672, %v436
    %v674 = vadd.f32 %v673, 1e-05
    %v675 = vrsqrt.pop %v674
    %v676 = vmul.f32 %v668, %v675
    %677 = vst.msk [vmem:[#allocation14 + $0x8] sm:$0xff] %vm116, %v676
    // Predicated region
    $region54: #{multi_rela_graph_node_update_forward.1} parent=1 // pred_check
      _
    $region55: #{multi_rela_graph_node_update_forward.1} parent=1 // pred_check_branch
      %679 = sbr.rel (0) target = $region57
    $region56: #{multi_rela_graph_node_update_forward.1} parent=1 // pred_region
      %s681 = ssub.s32 128, 128
      %682 = vsyncadd [#allocation4], %s681
      %s684 = sshll.u32 [#allocation13], 4
      %s685 = int_to_ptr.vmem [resolvable:$true] %s684
      %687 = dma.vmem_to_hbm [thread:$0]  %s685, 128, %s7, [#allocation4]
    $region57: #{multi_rela_graph_node_update_forward.1} parent=1 // pred_fallthru
      _
    // Predicated region
    $region58: #{multi_rela_graph_node_update_forward.1} parent=1 // pred_check
      _
    $region59: #{multi_rela_graph_node_update_forward.1} parent=1 // pred_check_branch
      %689 = sbr.rel (0) target = $region61
    $region60: #{multi_rela_graph_node_update_forward.1} parent=1 // pred_region
      %s691 = ssub.s32 256, 256
      %692 = vsyncadd [#allocation15], %s691
      %s693 = sshll.u32 [#allocation14], 4
      %s694 = int_to_ptr.vmem [resolvable:$true] %s693
      %699 = dma.vmem_to_hbm [thread:$0]  %s694, 256, %s8, [#allocation15], 128, 128, 8
    $region61: #{multi_rela_graph_node_update_forward.1} parent=1 // pred_fallthru
      _
    // Predicated region
    $region62: #{multi_rela_graph_node_update_forward.1} parent=1 // pred_check
      _
    $region63: #{multi_rela_graph_node_update_forward.1} parent=1 // pred_check_branch
      %701 = sbr.rel (0) target = $region65
    $region64: #{multi_rela_graph_node_update_forward.1} parent=1 // pred_region
      %702 = dma.done [#allocation4], 128
    $region65: #{multi_rela_graph_node_update_forward.1} parent=1 // pred_fallthru
      _
    // Predicated region
    $region66: #{multi_rela_graph_node_update_forward.1} parent=1 // pred_check
      _
    $region67: #{multi_rela_graph_node_update_forward.1} parent=1 // pred_check_branch
      %704 = sbr.rel (0) target = $region69
    $region68: #{multi_rela_graph_node_update_forward.1} parent=1 // pred_region
      %705 = dma.done [#allocation15], 256
    $region69: #{multi_rela_graph_node_update_forward.1} parent=1 // pred_fallthru
      _
    %706 = vsyncpa [#allocation3], 1
    %707 = vsyncpa [#allocation6], 1
    %708 = vsyncpa [#allocation9], 1
    %709 = vsyncpa [#allocation12], 1
    %710 = vsyncpa [#allocation4], 1
    %711 = vsyncpa [#allocation15], 1

</llo_original>
